<compile_context>
chip_gen: v7x
topology: tpu7x:2x2x1
jax: 0.10.0
libtpu: 0.0.40
codegen_flags: <defaults>
</compile_context>

<pallas_src>
import numpy as np
import jax
import jax.numpy as jnp
from jax.experimental import pallas as pl
from jax.experimental.pallas import tpu as pltpu


# ----------------------------------------------------------------------------
# Deterministic parameter construction (numpy re-implementation of bs /
# spline_factory using the Cox-de Boor recursion instead of scipy.splev).
# ----------------------------------------------------------------------------
def _bspline_basis_matrix(x, knots, degree):
    """All B-spline basis functions of given degree on `knots`, evaluated at x."""
    x = np.asarray(x, dtype=float)
    t = np.asarray(knots, dtype=float)
    n_basis = len(t) - degree - 1

    # Degree-0 basis.
    B = np.zeros((len(x), len(t) - 1), dtype=float)
    for i in range(len(t) - 1):
        if t[i] < t[i + 1]:
            B[:, i] = ((x >= t[i]) & (x < t[i + 1])).astype(float)
    # Right-boundary convention: x == t[-1] belongs to the last nonempty interval.
    lt = np.where(t < t[-1])[0]
    if len(lt) > 0:
        B[x == t[-1], lt[-1]] = 1.0

    # Cox-de Boor recursion (0/0 := 0).
    for d in range(1, degree + 1):
        Bn = np.zeros((len(x), len(t) - d - 1), dtype=float)
        for i in range(len(t) - d - 1):
            term = np.zeros(len(x), dtype=float)
            den1 = t[i + d] - t[i]
            den2 = t[i + d + 1] - t[i + 1]
            if den1 > 0:
                term += (x - t[i]) / den1 * B[:, i]
            if den2 > 0:
                term += (t[i + d + 1] - x) / den2 * B[:, i + 1]
            Bn[:, i] = term
        B = Bn
    return B[:, :n_basis]


def bs_np(x, df=None, knots=None, degree=3, intercept=False):
    order = degree + 1
    inner_knots = []
    if df is not None and knots is None:
        n_inner_knots = df - order + (1 - intercept)
        if n_inner_knots < 0:
            n_inner_knots = 0
        if n_inner_knots > 0:
            inner_knots = np.percentile(
                x, 100 * np.linspace(0, 1, n_inner_knots + 2)[1:-1])
    elif knots is not None:
        inner_knots = knots
    all_knots = np.concatenate(([np.min(x), np.max(x)] * order, inner_knots))
    all_knots.sort()
    basis = _bspline_basis_matrix(x, all_knots, degree)
    if not intercept:
        basis = basis[:, 1:]
    return basis


def spline_factory_np(n, df, log=False):
    if log:
        dist = np.array(np.arange(n) - n / 2.0)
        dist = np.log(np.abs(dist) + 1) * (2 * (dist > 0) - 1)
        n_knots = df - 4
        knots = np.linspace(np.min(dist), np.max(dist), n_knots + 2)[1:-1]
        return bs_np(dist, knots=knots, intercept=True).astype(np.float32)
    else:
        dist = np.arange(n)
        return bs_np(dist, df=df, intercept=True).astype(np.float32)


# ----------------------------------------------------------------------------
# Chip-aware tile selection.
# ----------------------------------------------------------------------------
def _chip_kind():
    try:
        return jax.devices()[0].device_kind.lower()
    except Exception:
        return ""


def _round_up_8(n):
    return ((int(n) + 7) // 8) * 8


def _select_tile(M, K, df, itemsize, tm_override=None):
    """Return (tm_eff, grid_m, vmem_limit_bytes_or_None)."""
    kind = _chip_kind()
    is_v7 = "7" in kind                      # e.g. "tpu7x", "tpu v7x"
    is_v5e = ("v5 lite" in kind) or ("v5e" in kind) or ("v5litepod" in kind)

    if tm_override is not None:
        tm = int(tm_override)
    elif is_v7:
        # ~3.2 TB/s HBM: need 4-8 MiB input tiles to dominate per-step overhead.
        tm = 8192
    elif is_v5e:
        # 16 MiB scoped-VMEM default: cap at 4 MiB per input buffer.
        tm = 4096
    else:
        # v6e / default: 4 MiB input tile lands on the ~86% roofline plateau.
        tm = 4096

    # Adapt down for small inputs (rounded up to the 8-sublane tile).
    tm_eff = min(tm, _round_up_8(M))
    grid_m = pl.cdiv(M, tm_eff)

    # v7x has 2 TensorCores; with dimension_semantics=("parallel",) a 1-step
    # grid leaves one core idle.  Split mid-size inputs into (at least) 2 blocks.
    if is_v7 and grid_m == 1 and M >= 16:
        tm_eff = _round_up_8(pl.cdiv(M, 2))
        grid_m = pl.cdiv(M, tm_eff)

    # Estimated VMEM footprint: double-buffered input + output, resident weight.
    need = (2 * (tm_eff * K + tm_eff * df) + 2 * K * df) * itemsize
    vmem_limit = None
    if need > (12 << 20):
        vmem_limit = int(min(need + (8 << 20), 48 << 20))

    return tm_eff, grid_m, vmem_limit


# ----------------------------------------------------------------------------
# Pallas kernel: (tm, K) @ (K, df) -> (tm, df) per grid step.
# ----------------------------------------------------------------------------
def _matmul_kernel(x_ref, w_ref, o_ref):
    o_ref[...] = jnp.dot(
        x_ref[...], w_ref[...], preferred_element_type=jnp.float32
    ).astype(o_ref.dtype)


def bspline_transformation(x, spline_tr, *, tm=None):
    """out = matmul(x, spline_tr) over the trailing axis of x."""
    orig_lead = x.shape[:-1]
    K = x.shape[-1]
    df = spline_tr.shape[-1]
    assert spline_tr.shape[0] == K

    M = int(np.prod(orig_lead)) if orig_lead else 1
    x2 = x.reshape(M, K)  # contiguous flatten of leading dims

    itemsize = jnp.dtype(x.dtype).itemsize
    tm_eff, grid_m, vmem_limit = _select_tile(M, K, df, itemsize, tm_override=tm)

    cost = pl.CostEstimate(
        flops=2 * M * K * df,
        transcendentals=0,
        bytes_accessed=(M * K + K * df + M * df) * itemsize,
    )

    out = pl.pallas_call(
        _matmul_kernel,
        out_shape=jax.ShapeDtypeStruct((M, df), x.dtype),
        grid_spec=pltpu.PrefetchScalarGridSpec(
            num_scalar_prefetch=0,
            grid=(grid_m,),
            in_specs=[
                pl.BlockSpec((tm_eff, K), lambda i: (i, 0)),   # streamed row tile
                pl.BlockSpec((K, df), lambda i: (0, 0)),       # resident basis
            ],
            out_specs=pl.BlockSpec((tm_eff, df), lambda i: (i, 0)),
        ),
        compiler_params=pltpu.CompilerParams(
            dimension_semantics=("parallel",),
            vmem_limit_bytes=vmem_limit),
        cost_estimate=cost,
    )(x2, spline_tr)

    return out.reshape(*orig_lead, df)


# ----------------------------------------------------------------------------
if __name__ == "__main__":
    # Module config: degrees_of_freedom=16, log=False, scaled=False.
    DF = 16
    N_POINTS = 256  # fixed in __init__: spline_factory(256, df)

    spline_tr = jnp.asarray(spline_factory_np(N_POINTS, DF, log=False))
    assert spline_tr.shape == (N_POINTS, DF)

    key = jax.random.PRNGKey(0)

    # Small input consistent with forward: trailing dim must be 256.
    x_small = jax.random.normal(key, (2, 4, N_POINTS), dtype=jnp.float32)
    out_small = jax.block_until_ready(bspline_transformation(x_small, spline_tr))
    ref_small = jnp.matmul(x_small, spline_tr)
    np.testing.assert_allclose(np.asarray(out_small), np.asarray(ref_small),
                               rtol=1e-5, atol=1e-5)
    assert out_small.shape == (2, 4, DF)

    # Second check exercising the multi-block / ragged-last-block / v7x-split
    # path (M = 1200 rows).
    x_big = jax.random.normal(key, (2, 600, N_POINTS), dtype=jnp.float32)
    out_big = jax.block_until_ready(bspline_transformation(x_big, spline_tr))
    ref_big = jnp.matmul(x_big, spline_tr)
    np.testing.assert_allclose(np.asarray(out_big), np.asarray(ref_big),
                               rtol=1e-5, atol=1e-5)
    assert out_big.shape == (2, 600, DF)

    # Third check: forced large tile + explicit multi-step grid on any chip
    # (M = 9600 rows -> at least 2-3 grid steps with the default tiles).
    x_huge = jax.random.normal(key, (4, 2400, N_POINTS), dtype=jnp.float32)
    out_huge = jax.block_until_ready(bspline_transformation(x_huge, spline_tr))
    ref_huge = jnp.matmul(x_huge, spline_tr)
    np.testing.assert_allclose(np.asarray(out_huge), np.asarray(ref_huge),
                               rtol=1e-5, atol=1e-5)
    assert out_huge.shape == (4, 2400, DF)

    print("KERNEL_OK")
</pallas_src>

<mosaic_0001>
module attributes {stable_mosaic.version = 11 : i64} {
  func.func @_matmul_kernel(%arg0: i32, %arg1: memref<8x256xf32, #tpu.memory_space<vmem>>, %arg2: memref<256x16xf32, #tpu.memory_space<vmem>>, %arg3: memref<8x16xf32, #tpu.memory_space<vmem>>) attributes {dimension_semantics = [#tpu.dimension_semantics<parallel>], iteration_bounds = array<i64: 1>, scalar_prefetch = 0 : i64, scratch_operands = 0 : i64, tpu.core_type = #tpu.core_type<tc>, window_params = [{transform_indices = @transform_0, window_bounds = array<i64: 8, 256>}, {pipeline_mode = #tpu.pipeline_mode<synchronous>, transform_indices = @transform_1, window_bounds = array<i64: 256, 16>}, {transform_indices = @transform_2, window_bounds = array<i64: 8, 16>}]} {
    %c0 = arith.constant 0 : index
    %c0_0 = arith.constant 0 : index
    %0 = vector.load %arg1[%c0, %c0_0] : memref<8x256xf32, #tpu.memory_space<vmem>>, vector<8x256xf32>
    %c0_1 = arith.constant 0 : index
    %c0_2 = arith.constant 0 : index
    %1 = vector.load %arg2[%c0_1, %c0_2] : memref<256x16xf32, #tpu.memory_space<vmem>>, vector<256x16xf32>
    %cst = arith.constant dense<0.000000e+00> : vector<8x16xf32>
    %2 = tpu.matmul %0, %1, %cst {dimension_numbers = #tpu.dot_dimension_numbers<[1], [0], [0], [1], [0, 0, 1, 1], [], []>} : vector<8x256xf32>, vector<256x16xf32>, vector<8x16xf32> -> vector<8x16xf32>
    %c0_3 = arith.constant 0 : index
    %c0_4 = arith.constant 0 : index
    %3 = vector.load %arg3[%c0_3, %c0_4] : memref<8x16xf32, #tpu.memory_space<vmem>>, vector<8x16xf32>
    tpu.vector_store %arg3[%c0_3, %c0_4], %2 {strides = array<i32>} : memref<8x16xf32, #tpu.memory_space<vmem>>, vector<8x16xf32>,
    return
  }
  func.func @transform_0(%arg0: i32) -> (i32, i32) {
    %c0_i32 = arith.constant 0 : i32
    %c0_i32_0 = arith.constant 0 : i32
    return %arg0, %c0_i32 : i32, i32
  }
  func.func @transform_1(%arg0: i32) -> (i32, i32) {
    %c0_i32 = arith.constant 0 : i32
    %c0_i32_0 = arith.constant 0 : i32
    %c0_i32_1 = arith.constant 0 : i32
    return %c0_i32, %c0_i32_0 : i32, i32
  }
  func.func @transform_2(%arg0: i32) -> (i32, i32) {
    %c0_i32 = arith.constant 0 : i32
    %c0_i32_0 = arith.constant 0 : i32
    return %arg0, %c0_i32 : i32, i32
  }
}

</mosaic_0001>

<llo_original>
// kernel: tpu_custom_call.1
$region0: #{tpu_custom_call.1}
  #allocation0 [shape = 'u32[]', space=smem, size = 0x4, offset = 0x4, fixed_abs, tag = 'smem constant byte address 0x4 - core index']
  #allocation1 [shape = 'u32[144,128]{1,0:T(1,128)}', space=vmem, size = 0x12000, scoped, tag = 'internal scratch']
  %s0 = inlined_call_operand.vmem [shape: f32[8,256], index: 0, kind: input, shape index: {}]
  %s1 = inlined_call_operand.vmem [shape: f32[256,16], index: 1, kind: input, shape index: {}]
  %s2 = inlined_call_operand.hbm [shape: f32[8,16], index: 2, kind: output, shape index: {}]
  %s3 = sld [smem:[#allocation0]]
  $region18: #{tpu_custom_call.1} parent=0
    _
  %s5 = ssub.s32 1, %s3
  %s6 = scalar_select 0, %s5, %s3
  $region1: #{tpu_custom_call.1} parent=0
    #allocation2 [shape = 'u8[4096]{0}', space=vmem, size = 0x1000, scoped, tag = 'output window, operand 0, single buffered']
    #allocation3 [shape = 's32[1]{0}', space=sflag, size = 0x4, scoped, tag = 'scoped memory for tpu_custom_call.1']
    %7 = vsyncpa [#allocation3], 0
    // Predicated region
    $region2: #{tpu_custom_call.1} parent=1 // pred_check
      _
    $region3: #{tpu_custom_call.1} parent=1 // pred_check_branch
      %9 = sbr.rel (0) target = $region5
    $region4: #{tpu_custom_call.1} parent=1 // pred_region
      _
    $region5: #{tpu_custom_call.1} parent=1 // pred_fallthru
      _
    // Predicated region
    $region6: #{tpu_custom_call.1} parent=1 // pred_check
      _
    $region7: #{tpu_custom_call.1} parent=1 // pred_check_branch
      %11 = sbr.rel (0) target = $region9
    $region8: #{tpu_custom_call.1} parent=1 // pred_region
      _
    $region9: #{tpu_custom_call.1} parent=1 // pred_fallthru
      _
    %v12 = vld [vmem:[%s0] sm:$0xff]
    %v13 = vld [vmem:[%s0 + $0x8] sm:$0xff]
    %v14 = vld [vmem:[%s1] sm:$0xff]
    %v15 = vld [vmem:[%s1 + $0x8] sm:$0xff]
    %v16 = vld [vmem:[%s1 + $0x10] sm:$0xff]
    %v17 = vld [vmem:[%s1 + $0x18] sm:$0xff]
    %v18 = vld [vmem:[%s1 + $0x20] sm:$0xff]
    %v19 = vld [vmem:[%s1 + $0x28] sm:$0xff]
    %v20 = vld [vmem:[%s1 + $0x30] sm:$0xff]
    %v21 = vld [vmem:[%s1 + $0x38] sm:$0xff]
    %v22 = vld [vmem:[%s1 + $0x40] sm:$0xff]
    %v23 = vld [vmem:[%s1 + $0x48] sm:$0xff]
    %v24 = vld [vmem:[%s1 + $0x50] sm:$0xff]
    %v25 = vld [vmem:[%s1 + $0x58] sm:$0xff]
    %v26 = vld [vmem:[%s1 + $0x60] sm:$0xff]
    %v27 = vld [vmem:[%s1 + $0x68] sm:$0xff]
    %v28 = vld [vmem:[%s1 + $0x70] sm:$0xff]
    %v29 = vld [vmem:[%s1 + $0x78] sm:$0xff]
    %v30 = vld [vmem:[%s1 + $0x80] sm:$0xff]
    %v31 = vld [vmem:[%s1 + $0x88] sm:$0xff]
    %v32 = vld [vmem:[%s1 + $0x90] sm:$0xff]
    %v33 = vld [vmem:[%s1 + $0x98] sm:$0xff]
    %v34 = vld [vmem:[%s1 + $0xa0] sm:$0xff]
    %v35 = vld [vmem:[%s1 + $0xa8] sm:$0xff]
    %v36 = vld [vmem:[%s1 + $0xb0] sm:$0xff]
    %v37 = vld [vmem:[%s1 + $0xb8] sm:$0xff]
    %v38 = vld [vmem:[%s1 + $0xc0] sm:$0xff]
    %v39 = vld [vmem:[%s1 + $0xc8] sm:$0xff]
    %v40 = vld [vmem:[%s1 + $0xd0] sm:$0xff]
    %v41 = vld [vmem:[%s1 + $0xd8] sm:$0xff]
    %v42 = vld [vmem:[%s1 + $0xe0] sm:$0xff]
    %v43 = vld [vmem:[%s1 + $0xe8] sm:$0xff]
    %v44 = vld [vmem:[%s1 + $0xf0] sm:$0xff]
    %v45 = vld [vmem:[%s1 + $0xf8] sm:$0xff]
    %46 = vmatprep.subr.mxu0 0.0
    %47 = vmatpush1.msra.mxu0 %v14
    %48 = vmatprep.subr.mxu0 0.0
    %49 = vmatpush1.msra.mxu0 %v15
    %50 = vmatprep.subr.mxu0 0.0
    %51 = vmatpush1.msra.mxu0 %v16
    %52 = vmatprep.subr.mxu0 0.0
    %53 = vmatpush1.msra.mxu0 %v17
    %54 = vmatprep.subr.mxu0 0.0
    %55 = vmatpush1.msra.mxu0 %v18
    %56 = vmatprep.subr.mxu0 0.0
    %57 = vmatpush1.msra.mxu0 %v19
    %58 = vmatprep.subr.mxu0 0.0
    %59 = vmatpush1.msra.mxu0 %v20
    %60 = vmatprep.subr.mxu0 0.0
    %61 = vmatpush1.msra.mxu0 %v21
    %62 = vmatprep.subr.mxu0 0.0
    %63 = vmatpush1.msra.mxu0 %v22
    %64 = vmatprep.subr.mxu0 0.0
    %65 = vmatpush1.msra.mxu0 %v23
    %66 = vmatprep.subr.mxu0 0.0
    %67 = vmatpush1.msra.mxu0 %v24
    %68 = vmatprep.subr.mxu0 0.0
    %69 = vmatpush1.msra.mxu0 %v25
    %70 = vmatprep.subr.mxu0 0.0
    %71 = vmatpush1.msra.mxu0 %v26
    %72 = vmatprep.subr.mxu0 0.0
    %73 = vmatpush1.msra.mxu0 %v27
    %74 = vmatprep.subr.mxu0 0.0
    %75 = vmatpush1.msra.mxu0 %v28
    %76 = vmatprep.subr.mxu0 0.0
    %77 = vmatpush1.msra.mxu0 %v29
    %78 = vmatprep.subr.mxu0 0.0
    %79 = vmatpush1.msra.mxu0 %v30
    %80 = vmatprep.subr.mxu0 0.0
    %81 = vmatpush1.msra.mxu0 %v31
    %82 = vmatprep.subr.mxu0 0.0
    %83 = vmatpush1.msra.mxu0 %v32
    %84 = vmatprep.subr.mxu0 0.0
    %85 = vmatpush1.msra.mxu0 %v33
    %86 = vmatprep.subr.mxu0 0.0
    %87 = vmatpush1.msra.mxu0 %v34
    %88 = vmatprep.subr.mxu0 0.0
    %89 = vmatpush1.msra.mxu0 %v35
    %90 = vmatprep.subr.mxu0 0.0
    %91 = vmatpush1.msra.mxu0 %v36
    %92 = vmatprep.subr.mxu0 0.0
    %93 = vmatpush1.msra.mxu0 %v37
    %94 = vmatprep.subr.mxu0 0.0
    %95 = vmatpush1.msra.mxu0 %v38
    %96 = vmatprep.subr.mxu0 0.0
    %97 = vmatpush1.msra.mxu0 %v39
    %98 = vmatprep.subr.mxu0 0.0
    %99 = vmatpush1.msra.mxu0 %v40
    %100 = vmatprep.subr.mxu0 0.0
    %101 = vmatpush1.msra.mxu0 %v41
    %102 = vmatprep.subr.mxu0 0.0
    %103 = vmatpush1.msra.mxu0 %v42
    %104 = vmatprep.subr.mxu0 0.0
    %105 = vmatpush1.msra.mxu0 %v43
    %106 = vmatprep.subr.mxu0 0.0
    %107 = vmatpush1.msra.mxu0 %v44
    %108 = vmatprep.subr.mxu0 0.0
    %109 = vmatpush1.msra.mxu0 %v45
    %110 = vmatprep.mubr.f32.mxu0 %v13
    %111 = vmatmul.mubr.f32.gmra.mrb[0].mxu0 %v12
    %v112 = vpop.f32.mrb[0].mxu0
    %v113 = vadd.f32 0.0, %v112
    %v114 = vpop.f32.mrb[0].mxu0
    %115 = vdwg.mxu0
    %vm116 = vcmask 130048
    %117 = vst.msk [vmem:[#allocation2] sm:$0xff] %vm116, %v113
    // Predicated region
    $region10: #{tpu_custom_call.1} parent=1 // pred_check
      _
    $region11: #{tpu_custom_call.1} parent=1 // pred_check_branch
      %119 = sbr.rel (0) target = $region13
    $region12: #{tpu_custom_call.1} parent=1 // pred_region
      %s121 = ssub.s32 128, 128
      %122 = vsyncadd [#allocation3], %s121
      %s124 = sshll.u32 [#allocation2], 4
      %s125 = int_to_ptr.vmem [resolvable:$true] %s124
      %127 = dma.vmem_to_hbm [thread:$0]  %s125, 128, %s2, [#allocation3]
    $region13: #{tpu_custom_call.1} parent=1 // pred_fallthru
      _
    // Predicated region
    $region14: #{tpu_custom_call.1} parent=1 // pred_check
      _
    $region15: #{tpu_custom_call.1} parent=1 // pred_check_branch
      %129 = sbr.rel (0) target = $region17
    $region16: #{tpu_custom_call.1} parent=1 // pred_region
      %130 = dma.done [#allocation3], 128
    $region17: #{tpu_custom_call.1} parent=1 // pred_fallthru
      _
    %131 = vsyncpa [#allocation3], 1

</llo_original>
